<compile_context>
chip_gen: v6e
topology: v6e:2x2x1
jax: 0.10.0
libtpu: 0.0.40
codegen_flags: <defaults>
</compile_context>

<pallas_src>
import jax
import jax.numpy as jnp
from jax import lax
from jax.experimental import pallas as pl
from jax.experimental.pallas import tpu as pltpu


_FEAT_BLOCK_BUDGET_BYTES = 4 * 1024 * 1024   # per-step feature tile (x2 when double-buffered)
_MIN_TOTAL_GRID_STEPS = 4                    # >=2 iterations per TensorCore on v7x megacore


def _ffia_kernel(feat_ref, ctxh_ref, w1f_ref, w2_ref, out_ref, attn_ref,
                 m_sc, l_sc, acc_sc):
    # feat_ref : (F, THW)  native NCHW slice: channels on sublanes, pixels on lanes
    # ctxh_ref : (Hd, 1)   fc1_context(context) + bias for this batch element
    # w1f_ref  : (Hd, F)   fc1_feature weight (natural orientation, no transpose)
    # w2_ref   : (Hd, 1)   fc2 weight as a column vector
    # out_ref  : (1, F)    weighted feature output for this batch element
    # attn_ref : (1, HW)   attention output; also used as the raw-score stash
    # m_sc/l_sc: (1, 1)    online-softmax running max / running sum
    # acc_sc   : (1, F)    running (unnormalized) weighted feature sum
    p = pl.program_id(1)
    last = pl.num_programs(1) - 1
    THW = feat_ref.shape[1]

    @pl.when(p == 0)
    def _():
        m_sc[...] = jnp.full_like(m_sc, -jnp.inf)
        l_sc[...] = jnp.zeros_like(l_sc)
        acc_sc[...] = jnp.zeros_like(acc_sc)

    # fc1_feature (1x1 conv, no bias): (Hd, F) @ (F, THW) on the MXU.
    hidden = jnp.dot(w1f_ref[...], feat_ref[...],
                     preferred_element_type=jnp.float32)            # (Hd, THW)
    # fc1_context broadcast over pixels (lane broadcast), ReLU.
    x = jnp.maximum(hidden + ctxh_ref[...], 0.0)                    # (Hd, THW)
    # fc2 (Hd -> 1): VPU multiply + sublane reduce over Hd.
    # fc2 bias dropped: softmax is shift-invariant, so it cannot change outputs.
    s = jnp.sum(x * w2_ref[...], axis=0, keepdims=True)             # (1, THW)

    # Stash the raw scores of this tile in the resident attention output buffer.
    start = pl.multiple_of(p * THW, THW)
    attn_ref[:, pl.ds(start, THW)] = s

    # Online softmax statistics + unnormalized weighted feature sum.
    m_prev = m_sc[...]
    m_new = jnp.maximum(m_prev, jnp.max(s, axis=-1, keepdims=True))
    alpha = jnp.exp(m_prev - m_new)
    e = jnp.exp(s - m_new)                                           # (1, THW)
    l_sc[...] = alpha * l_sc[...] + jnp.sum(e, axis=-1, keepdims=True)
    m_sc[...] = m_new
    # (1, THW) x (F, THW)^T -> (1, F): same q@k^T MXU pattern as flash attention.
    part = lax.dot_general(e, feat_ref[...], (((1,), (1,)), ((), ())),
                           preferred_element_type=jnp.float32)       # (1, F)
    acc_sc[...] = alpha * acc_sc[...] + part

    @pl.when(p == last)
    def _():
        inv_l = pl.reciprocal(l_sc[...], approx=True)                # EUP slot
        out_ref[...] = (acc_sc[...] * inv_l).astype(out_ref.dtype)
        attn_ref[...] = (jnp.exp(attn_ref[...] - m_sc[...]) * inv_l
                         ).astype(attn_ref.dtype)


def _choose_hw_block(HW, F, B, feat_budget_bytes):
    """Largest legal H*W tile (divisor of HW, multiple of 128 or == HW) within the
    feature-tile VMEM budget, preferring >= _MIN_TOTAL_GRID_STEPS total grid steps."""
    divisors = [d for d in range(1, HW + 1) if HW % d == 0]
    legal = [d for d in divisors
             if (d % 128 == 0 or d == HW) and d * F * 4 <= feat_budget_bytes]
    if not legal:
        # TODO(synk): pad HW to a multiple of 128 (with -inf score masking) so very
        # large, oddly-sized feature maps can still be tiled; fall back to one tile.
        return HW
    deep_enough = [d for d in legal if B * (HW // d) >= _MIN_TOTAL_GRID_STEPS]
    return max(deep_enough) if deep_enough else min(legal)


def _vmem_limit_bytes(F, HW, THW, Hd):
    pad = lambda n, m: -(-n // m) * m
    est = (2 * F * THW * 4                            # double-buffered feature tile
           + 2 * pad(Hd, 8) * pad(F, 128) * 4         # fc1_feature weight
           + 4 * pad(Hd, 8) * 128 * 4                 # ctx hidden + fc2 weight blocks
           + 2 * 8 * pad(F, 128) * 4                  # out buffer
           + 2 * 8 * pad(HW, 128) * 4                 # attn buffer (raw-score stash)
           + 8 * pad(F, 128) * 4 + 2 * 8 * 128 * 4    # acc / m / l scratch
           + 4 * pad(Hd, 8) * pad(THW, 128) * 4       # hidden / x temporaries
           + (4 << 20))                               # headroom
    try:
        cap = pltpu.get_tpu_info().vmem_capacity_bytes
    except Exception:
        cap = 64 * 1024 * 1024                        # v7x per-TC physical (most restrictive)
    return int(min(cap * 3 // 4, max(est, 16 * 1024 * 1024)))


def feedforward_image_attention(feature, context, params, hw_block=None):
    """feature: (B, F, H, W) f32, context: (B, C) f32. Returns ((B, F), (B, H*W))."""
    B, F, H, W = feature.shape
    Hd = params["w1f"].shape[0]
    HW = H * W

    if hw_block is None:
        THW = _choose_hw_block(HW, F, B, _FEAT_BLOCK_BUDGET_BYTES)
    else:
        THW = int(hw_block)
    assert HW % THW == 0 and (THW % 128 == 0 or THW == HW), "illegal H*W tile"
    grid_p = HW // THW

    # Layout glue is metadata-only (no extra HBM pass over the dominant tensor):
    # (B,F,H,W) -> (B,F,HW) keeps PyTorch's row-major .view flattening order.
    feat3 = feature.reshape(B, F, HW)
    # Hoisted fc1_context projection (tiny gemm) -> (B, Hd, 1).
    ctx_h = (context @ params["w1c"].T + params["b1c"]).reshape(B, Hd, 1)
    w1f = params["w1f"]                                  # (Hd, F), natural orientation
    w2 = params["w2"].reshape(Hd, 1)
    # params["b2"] is intentionally not passed: softmax is shift-invariant.

    out3, attn3 = pl.pallas_call(
        _ffia_kernel,
        out_shape=(
            jax.ShapeDtypeStruct((B, 1, F), jnp.float32),
            jax.ShapeDtypeStruct((B, 1, HW), jnp.float32),
        ),
        grid_spec=pltpu.PrefetchScalarGridSpec(
            num_scalar_prefetch=0,
            grid=(B, grid_p),
            in_specs=[
                pl.BlockSpec((None, F, THW), lambda b, p: (b, 0, p)),  # feature tile
                pl.BlockSpec((None, Hd, 1), lambda b, p: (b, 0, 0)),   # ctx hidden
                pl.BlockSpec((Hd, F), lambda b, p: (0, 0)),            # fc1_feature W
                pl.BlockSpec((Hd, 1), lambda b, p: (0, 0)),            # fc2 W (column)
            ],
            out_specs=[
                pl.BlockSpec((None, 1, F), lambda b, p: (b, 0, 0)),
                pl.BlockSpec((None, 1, HW), lambda b, p: (b, 0, 0)),
            ],
            scratch_shapes=[
                pltpu.VMEM((1, 1), jnp.float32),   # running max
                pltpu.VMEM((1, 1), jnp.float32),   # running denom
                pltpu.VMEM((1, F), jnp.float32),   # weighted-sum accumulator
            ],
        ),
        compiler_params=pltpu.CompilerParams(
            dimension_semantics=("parallel", "arbitrary"),
            vmem_limit_bytes=_vmem_limit_bytes(F, HW, THW, Hd),
        ),
    )(feat3, ctx_h, w1f, w2)

    return out3.reshape(B, F), attn3.reshape(B, HW)


def reference_forward(feature, context, params):
    """Pure-JAX reimplementation of the PyTorch forward (for verification)."""
    B, F, H, W = feature.shape
    fh = jnp.einsum("bfhw,of->bohw", feature, params["w1f"])
    ch = context @ params["w1c"].T + params["b1c"]
    x = jnp.maximum(fh + ch[:, :, None, None], 0.0)
    s = jnp.einsum("bohw,o->bhw", x, params["w2"]) + params["b2"]
    attn = jax.nn.softmax(s.reshape(B, -1), axis=1)
    out = jnp.einsum("bfp,bp->bf", feature.reshape(B, F, -1), attn)
    return out, attn


if __name__ == "__main__":
    # Small, module-consistent shapes.
    B, C, Hd, F, H, W = 2, 8, 32, 256, 16, 16

    key = jax.random.PRNGKey(0)
    k_feat, k_ctx, k1, k2, k3, k4, k5 = jax.random.split(key, 7)

    # Deterministic synthetic parameters (shapes follow the nn.Module __init__).
    params = {
        "w1f": 0.05 * jax.random.normal(k1, (Hd, F), jnp.float32),  # Conv2d(F, Hd, 1, bias=False)
        "w1c": 0.05 * jax.random.normal(k2, (Hd, C), jnp.float32),  # Linear(C, Hd).weight
        "b1c": 0.05 * jax.random.normal(k3, (Hd,), jnp.float32),    # Linear(C, Hd).bias
        "w2": 0.05 * jax.random.normal(k4, (Hd,), jnp.float32),     # Conv2d(Hd, 1, 1).weight
        "b2": 0.05 * jax.random.normal(k5, (), jnp.float32),        # Conv2d(Hd, 1, 1).bias
    }

    feature = jax.random.normal(k_feat, (B, F, H, W), jnp.float32)
    context = jax.random.normal(k_ctx, (B, C), jnp.float32)

    out_ref, attn_ref = reference_forward(feature, context, params)

    # Auto tile choice (HW=256 -> THW=128, exercises the online-softmax tiled path).
    out, attn = feedforward_image_attention(feature, context, params)
    out, attn = jax.block_until_ready((out, attn))
    assert out.shape == (B, F) and attn.shape == (B, H * W)
    assert jnp.allclose(out, out_ref, rtol=2e-3, atol=2e-3)
    assert jnp.allclose(attn, attn_ref, rtol=2e-3, atol=2e-3)

    # Single-tile path (THW == HW) must match as well.
    out1, attn1 = feedforward_image_attention(feature, context, params, hw_block=H * W)
    out1, attn1 = jax.block_until_ready((out1, attn1))
    assert jnp.allclose(out1, out_ref, rtol=2e-3, atol=2e-3)
    assert jnp.allclose(attn1, attn_ref, rtol=2e-3, atol=2e-3)

    print("KERNEL_OK")
</pallas_src>

<mosaic_0001>
module attributes {stable_mosaic.version = 11 : i64} {
  func.func @_ffia_kernel(%arg0: i32, %arg1: i32, %arg2: memref<1x256x128xf32, #tpu.memory_space<vmem>>, %arg3: memref<1x32x1xf32, #tpu.memory_space<vmem>>, %arg4: memref<32x256xf32, #tpu.memory_space<vmem>>, %arg5: memref<32x1xf32, #tpu.memory_space<vmem>>, %arg6: memref<1x1x256xf32, #tpu.memory_space<vmem>>, %arg7: memref<1x1x256xf32, #tpu.memory_space<vmem>>, %arg8: memref<1x1xf32, #tpu.memory_space<vmem>>, %arg9: memref<1x1xf32, #tpu.memory_space<vmem>>, %arg10: memref<1x256xf32, #tpu.memory_space<vmem>>) attributes {dimension_semantics = [#tpu.dimension_semantics<parallel>, #tpu.dimension_semantics<arbitrary>], iteration_bounds = array<i64: 2, 2>, scalar_prefetch = 0 : i64, scratch_operands = 3 : i64, tpu.core_type = #tpu.core_type<tc>, window_params = [{transform_indices = @transform_0, window_bounds = array<i64: 1, 256, 128>}, {transform_indices = @transform_1, window_bounds = array<i64: 1, 32, 1>}, {pipeline_mode = #tpu.pipeline_mode<synchronous>, transform_indices = @transform_2, window_bounds = array<i64: 32, 256>}, {pipeline_mode = #tpu.pipeline_mode<synchronous>, transform_indices = @transform_3, window_bounds = array<i64: 32, 1>}, {transform_indices = @transform_4, window_bounds = array<i64: 1, 1, 256>}, {transform_indices = @transform_5, window_bounds = array<i64: 1, 1, 256>}]} {
    %c0_i32 = arith.constant 0 : i32
    %0 = arith.cmpi eq, %arg1, %c0_i32 : i32
    %1 = arith.extui %0 : i1 to i32
    %c0_i32_0 = arith.constant 0 : i32
    %2 = arith.cmpi ne, %1, %c0_i32_0 : i32
    scf.if %2 {
      %cst_33 = arith.constant 0xFF800000 : f32
      %51 = vector.broadcast %cst_33 : f32 to vector<1x1xf32>
      %c0_34 = arith.constant 0 : index
      %c0_35 = arith.constant 0 : index
      %52 = vector.load %arg8[%c0_34, %c0_35] : memref<1x1xf32, #tpu.memory_space<vmem>>, vector<1x1xf32>
      tpu.vector_store %arg8[%c0_34, %c0_35], %51 {strides = array<i32>} : memref<1x1xf32, #tpu.memory_space<vmem>>, vector<1x1xf32>,
      %cst_36 = arith.constant 0.000000e+00 : f32
      %53 = vector.broadcast %cst_36 : f32 to vector<1x1xf32>
      %c0_37 = arith.constant 0 : index
      %c0_38 = arith.constant 0 : index
      %54 = vector.load %arg9[%c0_37, %c0_38] : memref<1x1xf32, #tpu.memory_space<vmem>>, vector<1x1xf32>
      tpu.vector_store %arg9[%c0_37, %c0_38], %53 {strides = array<i32>} : memref<1x1xf32, #tpu.memory_space<vmem>>, vector<1x1xf32>,
      %cst_39 = arith.constant 0.000000e+00 : f32
      %55 = vector.broadcast %cst_39 : f32 to vector<1x256xf32>
      %c0_40 = arith.constant 0 : index
      %c0_41 = arith.constant 0 : index
      %56 = vector.load %arg10[%c0_40, %c0_41] : memref<1x256xf32, #tpu.memory_space<vmem>>, vector<1x256xf32>
      tpu.vector_store %arg10[%c0_40, %c0_41], %55 {strides = array<i32>} : memref<1x256xf32, #tpu.memory_space<vmem>>, vector<1x256xf32>,
    } else {
    }
    %c0 = arith.constant 0 : index
    %c0_1 = arith.constant 0 : index
    %3 = vector.load %arg4[%c0, %c0_1] : memref<32x256xf32, #tpu.memory_space<vmem>>, vector<32x256xf32>
    %c0_2 = arith.constant 0 : index
    %c0_3 = arith.constant 0 : index
    %c0_4 = arith.constant 0 : index
    %4 = vector.load %arg2[%c0_2, %c0_3, %c0_4] : memref<1x256x128xf32, #tpu.memory_space<vmem>>, vector<1x256x128xf32>
    %5 = vector.shape_cast %4 : vector<1x256x128xf32> to vector<256x128xf32>
    %cst = arith.constant dense<0.000000e+00> : vector<32x128xf32>
    %6 = tpu.matmul %3, %5, %cst {dimension_numbers = #tpu.dot_dimension_numbers<[1], [0], [0], [1], [0, 0, 1, 1], [], []>} : vector<32x256xf32>, vector<256x128xf32>, vector<32x128xf32> -> vector<32x128xf32>
    %c0_5 = arith.constant 0 : index
    %c0_6 = arith.constant 0 : index
    %c0_7 = arith.constant 0 : index
    %7 = vector.load %arg3[%c0_5, %c0_6, %c0_7] : memref<1x32x1xf32, #tpu.memory_space<vmem>>, vector<1x32x1xf32>
    %8 = vector.shape_cast %7 : vector<1x32x1xf32> to vector<32x1xf32>
    %9 = vector.broadcast %8 : vector<32x1xf32> to vector<32x128xf32>
    %10 = arith.addf %6, %9 : vector<32x128xf32>
    %cst_8 = arith.constant 0.000000e+00 : f32
    %11 = vector.broadcast %cst_8 : f32 to vector<32x128xf32>
    %12 = arith.maximumf %10, %11 : vector<32x128xf32>
    %c0_9 = arith.constant 0 : index
    %c0_10 = arith.constant 0 : index
    %13 = vector.load %arg5[%c0_9, %c0_10] : memref<32x1xf32, #tpu.memory_space<vmem>>, vector<32x1xf32>
    %14 = vector.broadcast %13 : vector<32x1xf32> to vector<32x128xf32>
    %15 = arith.mulf %12, %14 : vector<32x128xf32>
    %cst_11 = arith.constant dense<0.000000e+00> : vector<128xf32>
    %16 = vector.multi_reduction <add>, %15, %cst_11 [0] : vector<32x128xf32> to vector<128xf32>
    %17 = vector.shape_cast %16 : vector<128xf32> to vector<1x128xf32>
    %c128_i32 = arith.constant 128 : i32
    %18 = arith.muli %arg1, %c128_i32 : i32
    %19 = tpu.assume_multiple %18, 128 : i32
    %c0_12 = arith.constant 0 : index
    %c0_13 = arith.constant 0 : index
    %20 = arith.index_cast %19 : i32 to index
    %21 = vector.load %arg7[%c0_12, %c0_13, %20] : memref<1x1x256xf32, #tpu.memory_space<vmem>>, vector<1x1x128xf32>
    %22 = vector.shape_cast %21 : vector<1x1x128xf32> to vector<1x128xf32>
    %23 = vector.shape_cast %17 : vector<1x128xf32> to vector<1x1x128xf32>
    tpu.vector_store %arg7[%c0_12, %c0_13, %20], %23 {strides = array<i32>} : memref<1x1x256xf32, #tpu.memory_space<vmem>>, vector<1x1x128xf32>,
    %c0_14 = arith.constant 0 : index
    %c0_15 = arith.constant 0 : index
    %24 = vector.load %arg8[%c0_14, %c0_15] : memref<1x1xf32, #tpu.memory_space<vmem>>, vector<1x1xf32>
    %cst_16 = arith.constant dense<0xFF800000> : vector<1xf32>
    %25 = vector.multi_reduction <maximumf>, %17, %cst_16 [1] : vector<1x128xf32> to vector<1xf32>
    %26 = vector.shape_cast %25 : vector<1xf32> to vector<1x1xf32>
    %27 = arith.maximumf %24, %26 : vector<1x1xf32>
    %28 = arith.subf %24, %27 : vector<1x1xf32>
    %29 = math.exp %28 : vector<1x1xf32>
    %30 = vector.broadcast %27 : vector<1x1xf32> to vector<1x128xf32>
    %31 = arith.subf %17, %30 : vector<1x128xf32>
    %32 = math.exp %31 : vector<1x128xf32>
    %c0_17 = arith.constant 0 : index
    %c0_18 = arith.constant 0 : index
    %33 = vector.load %arg9[%c0_17, %c0_18] : memref<1x1xf32, #tpu.memory_space<vmem>>, vector<1x1xf32>
    %34 = arith.mulf %29, %33 : vector<1x1xf32>
    %cst_19 = arith.constant dense<0.000000e+00> : vector<1xf32>
    %35 = vector.multi_reduction <add>, %32, %cst_19 [1] : vector<1x128xf32> to vector<1xf32>
    %36 = vector.shape_cast %35 : vector<1xf32> to vector<1x1xf32>
    %37 = arith.addf %34, %36 : vector<1x1xf32>
    %c0_20 = arith.constant 0 : index
    %c0_21 = arith.constant 0 : index
    %38 = vector.load %arg9[%c0_20, %c0_21] : memref<1x1xf32, #tpu.memory_space<vmem>>, vector<1x1xf32>
    tpu.vector_store %arg9[%c0_20, %c0_21], %37 {strides = array<i32>} : memref<1x1xf32, #tpu.memory_space<vmem>>, vector<1x1xf32>,
    %c0_22 = arith.constant 0 : index
    %c0_23 = arith.constant 0 : index
    %39 = vector.load %arg8[%c0_22, %c0_23] : memref<1x1xf32, #tpu.memory_space<vmem>>, vector<1x1xf32>
    tpu.vector_store %arg8[%c0_22, %c0_23], %27 {strides = array<i32>} : memref<1x1xf32, #tpu.memory_space<vmem>>, vector<1x1xf32>,
    %c0_24 = arith.constant 0 : index
    %c0_25 = arith.constant 0 : index
    %c0_26 = arith.constant 0 : index
    %40 = vector.load %arg2[%c0_24, %c0_25, %c0_26] : memref<1x256x128xf32, #tpu.memory_space<vmem>>, vector<1x256x128xf32>
    %41 = vector.shape_cast %40 : vector<1x256x128xf32> to vector<256x128xf32>
    %cst_27 = arith.constant dense<0.000000e+00> : vector<1x256xf32>
    %42 = tpu.matmul %32, %41, %cst_27 {dimension_numbers = #tpu.dot_dimension_numbers<[1], [1], [0], [0], [0, 0, 1, 0], [], []>} : vector<1x128xf32>, vector<256x128xf32>, vector<1x256xf32> -> vector<1x256xf32>
    %c0_28 = arith.constant 0 : index
    %c0_29 = arith.constant 0 : index
    %43 = vector.load %arg10[%c0_28, %c0_29] : memref<1x256xf32, #tpu.memory_space<vmem>>, vector<1x256xf32>
    %44 = vector.broadcast %29 : vector<1x1xf32> to vector<1x256xf32>
    %45 = arith.mulf %44, %43 : vector<1x256xf32>
    %46 = arith.addf %45, %42 : vector<1x256xf32>
    %c0_30 = arith.constant 0 : index
    %c0_31 = arith.constant 0 : index
    %47 = vector.load %arg10[%c0_30, %c0_31] : memref<1x256xf32, #tpu.memory_space<vmem>>, vector<1x256xf32>
    tpu.vector_store %arg10[%c0_30, %c0_31], %46 {strides = array<i32>} : memref<1x256xf32, #tpu.memory_space<vmem>>, vector<1x256xf32>,
    %c1_i32 = arith.constant 1 : i32
    %48 = arith.cmpi eq, %arg1, %c1_i32 : i32
    %49 = arith.extui %48 : i1 to i32
    %c0_i32_32 = arith.constant 0 : i32
    %50 = arith.cmpi ne, %49, %c0_i32_32 : i32
    scf.if %50 {
      %c0_33 = arith.constant 0 : index
      %c0_34 = arith.constant 0 : index
      %51 = vector.load %arg9[%c0_33, %c0_34] : memref<1x1xf32, #tpu.memory_space<vmem>>, vector<1x1xf32>
      %52 = tpu.reciprocal %51 {approx = true} : vector<1x1xf32> -> vector<1x1xf32>
      %c0_35 = arith.constant 0 : index
      %c0_36 = arith.constant 0 : index
      %53 = vector.load %arg10[%c0_35, %c0_36] : memref<1x256xf32, #tpu.memory_space<vmem>>, vector<1x256xf32>
      %54 = vector.broadcast %52 : vector<1x1xf32> to vector<1x256xf32>
      %55 = arith.mulf %53, %54 : vector<1x256xf32>
      %c0_37 = arith.constant 0 : index
      %c0_38 = arith.constant 0 : index
      %c0_39 = arith.constant 0 : index
      %56 = vector.load %arg6[%c0_37, %c0_38, %c0_39] : memref<1x1x256xf32, #tpu.memory_space<vmem>>, vector<1x1x256xf32>
      %57 = vector.shape_cast %56 : vector<1x1x256xf32> to vector<1x256xf32>
      %58 = vector.shape_cast %55 : vector<1x256xf32> to vector<1x1x256xf32>
      tpu.vector_store %arg6[%c0_37, %c0_38, %c0_39], %58 {strides = array<i32>} : memref<1x1x256xf32, #tpu.memory_space<vmem>>, vector<1x1x256xf32>,
      %c0_40 = arith.constant 0 : index
      %c0_41 = arith.constant 0 : index
      %c0_42 = arith.constant 0 : index
      %59 = vector.load %arg7[%c0_40, %c0_41, %c0_42] : memref<1x1x256xf32, #tpu.memory_space<vmem>>, vector<1x1x256xf32>
      %60 = vector.shape_cast %59 : vector<1x1x256xf32> to vector<1x256xf32>
      %c0_43 = arith.constant 0 : index
      %c0_44 = arith.constant 0 : index
      %61 = vector.load %arg8[%c0_43, %c0_44] : memref<1x1xf32, #tpu.memory_space<vmem>>, vector<1x1xf32>
      %62 = vector.broadcast %61 : vector<1x1xf32> to vector<1x256xf32>
      %63 = arith.subf %60, %62 : vector<1x256xf32>
      %64 = math.exp %63 : vector<1x256xf32>
      %65 = vector.broadcast %52 : vector<1x1xf32> to vector<1x256xf32>
      %66 = arith.mulf %64, %65 : vector<1x256xf32>
      %c0_45 = arith.constant 0 : index
      %c0_46 = arith.constant 0 : index
      %c0_47 = arith.constant 0 : index
      %67 = vector.load %arg7[%c0_45, %c0_46, %c0_47] : memref<1x1x256xf32, #tpu.memory_space<vmem>>, vector<1x1x256xf32>
      %68 = vector.shape_cast %67 : vector<1x1x256xf32> to vector<1x256xf32>
      %69 = vector.shape_cast %66 : vector<1x256xf32> to vector<1x1x256xf32>
      tpu.vector_store %arg7[%c0_45, %c0_46, %c0_47], %69 {strides = array<i32>} : memref<1x1x256xf32, #tpu.memory_space<vmem>>, vector<1x1x256xf32>,
    } else {
    }
    return
  }
  func.func @transform_0(%arg0: i32, %arg1: i32) -> (i32, i32, i32) {
    %c0_i32 = arith.constant 0 : i32
    %c0_i32_0 = arith.constant 0 : i32
    return %arg0, %c0_i32, %arg1 : i32, i32, i32
  }
  func.func @transform_1(%arg0: i32, %arg1: i32) -> (i32, i32, i32) {
    %c0_i32 = arith.constant 0 : i32
    %c0_i32_0 = arith.constant 0 : i32
    %c0_i32_1 = arith.constant 0 : i32
    return %arg0, %c0_i32, %c0_i32_0 : i32, i32, i32
  }
  func.func @transform_2(%arg0: i32, %arg1: i32) -> (i32, i32) {
    %c0_i32 = arith.constant 0 : i32
    %c0_i32_0 = arith.constant 0 : i32
    %c0_i32_1 = arith.constant 0 : i32
    return %c0_i32, %c0_i32_0 : i32, i32
  }
  func.func @transform_3(%arg0: i32, %arg1: i32) -> (i32, i32) {
    %c0_i32 = arith.constant 0 : i32
    %c0_i32_0 = arith.constant 0 : i32
    %c0_i32_1 = arith.constant 0 : i32
    return %c0_i32, %c0_i32_0 : i32, i32
  }
  func.func @transform_4(%arg0: i32, %arg1: i32) -> (i32, i32, i32) {
    %c0_i32 = arith.constant 0 : i32
    %c0_i32_0 = arith.constant 0 : i32
    %c0_i32_1 = arith.constant 0 : i32
    return %arg0, %c0_i32, %c0_i32_0 : i32, i32, i32
  }
  func.func @transform_5(%arg0: i32, %arg1: i32) -> (i32, i32, i32) {
    %c0_i32 = arith.constant 0 : i32
    %c0_i32_0 = arith.constant 0 : i32
    %c0_i32_1 = arith.constant 0 : i32
    return %arg0, %c0_i32, %c0_i32_0 : i32, i32, i32
  }
}

</mosaic_0001>

<llo_original>
// kernel: tpu_custom_call.1
$region0: #{tpu_custom_call.1}
  #allocation0 [shape = 'u32[]', space=smem, size = 0x4, offset = 0x4, fixed_abs, tag = 'smem constant byte address 0x4 - core index']
  #allocation1 [shape = 'u32[144,128]{1,0:T(1,128)}', space=vmem, size = 0x12000, scoped, tag = 'internal scratch']
  #allocation2 [shape = 'f32[1,1]{1,0:T(1,128)}', space=vmem, size = 0x200, scoped, tag = 'scratch operand']
  #allocation3 [shape = 'f32[1,1]{1,0:T(1,128)}', space=vmem, size = 0x200, scoped, tag = 'scratch operand']
  #allocation4 [shape = 'f32[1,256]{1,0:T(1,128)}', space=vmem, size = 0x400, scoped, tag = 'scratch operand']
  %s0 = inlined_call_operand.hbm [shape: f32[2,256,256], index: 0, kind: input, shape index: {}]
  %s1 = inlined_call_operand.vmem [shape: f32[2,32,1], index: 1, kind: input, shape index: {}]
  %s2 = inlined_call_operand.vmem [shape: f32[32,256], index: 2, kind: input, shape index: {}]
  %s3 = inlined_call_operand.vmem [shape: f32[32,1], index: 3, kind: input, shape index: {}]
  %s4 = inlined_call_operand.hbm [shape: f32[2,1,256], index: 4, kind: output, shape index: {0}]
  %s5 = inlined_call_operand.hbm [shape: f32[2,1,256], index: 5, kind: output, shape index: {1}]
  %6 = xla_tuple %s4, %s5
  %s7 = sld [smem:[#allocation0]]
  $region69: #{tpu_custom_call.1} parent=0
    _
  %s9 = ssub.s32 1, %s7
  %s10 = scalar_select 0, %s9, %s7
  $region1: #{tpu_custom_call.1} parent=0
    #allocation5 [shape = 'u8[262144]{0}', space=vmem, size = 0x40000, scoped, tag = 'input window, operand 0']
    #allocation6 [shape = 's32[2]{0}', space=sflag, size = 0x8, scoped, tag = 'scoped memory for tpu_custom_call.1']
    #allocation7 [shape = 's32[2]{0}', space=sflag, size = 0x8, scoped, tag = 'scoped memory for tpu_custom_call.1']
    #allocation8 [shape = 'u8[2048]{0}', space=vmem, size = 0x800, scoped, tag = 'output window, operand 0']
    #allocation9 [shape = 'u8[2048]{0}', space=vmem, size = 0x800, scoped, tag = 'output window, operand 1']
    #allocation10 [shape = 's32[2]{0}', space=sflag, size = 0x8, scoped, tag = 'scoped memory for tpu_custom_call.1']
    %11 = vsyncpa [#allocation6], 0
    %s12 = scalar_lea.sflag [#allocation6], 1
    %13 = vsyncpa %s12, 0
    %14 = vsyncpa [#allocation7], 0
    %s15 = scalar_lea.sflag [#allocation7], 1
    %16 = vsyncpa %s15, 0
    %17 = vsyncpa [#allocation10], 0
    %s18 = scalar_lea.sflag [#allocation10], 1
    %19 = vsyncpa %s18, 0
    loop: start=0, step=1, limit=6
    $region2: #{tpu_custom_call.1} parent=1 // loop_pre_header
      _
    $region3: #{tpu_custom_call.1} parent=1 // loop_header
      %s21 = sphi 0, %s25
      %p22 = scmp.ge.s32.totalorder %s21, 6
      %s28 = sphi 0, %s40
      %s29 = sphi 0, %s36
      %s30 = sphi 0, %s28
      %s31 = sphi 0, %s29
      %s32 = sphi 0, %s30
      %s33 = sphi 0, %s31
      %s45 = sphi 0, %s47
      %s48 = sphi 0, %s45
      %s49 = sphi 0, %s48
      %s65 = sphi 0, %s49
      %s71 = sphi 0, %s73
      %s74 = sphi 0, %s71
      %s75 = sphi 0, %s74
      %s91 = sphi 0, %s75
      %s95 = sphi 0, %s95
      %s97 = sphi 0, %s95
      %s98 = sphi 0, %s97
      %s112 = sphi 0, %s98
      %s116 = sphi 0, %s116
      %s118 = sphi 0, %s116
      %s119 = sphi 0, %s118
      %s133 = sphi 0, %s119
      %s139 = sphi 0, %s141
      %s142 = sphi 0, %s139
      %s143 = sphi 0, %s142
      %s159 = sphi 0, %s143
      %s165 = sphi 0, %s167
      %s168 = sphi 0, %s165
      %s169 = sphi 0, %s168
      %s185 = sphi 0, %s169
    $region4: #{tpu_custom_call.1} parent=1 // loop_header_branch
      %24 = sbr.rel (%p22) target = $region8
    $region5: #{tpu_custom_call.1} parent=1 // loop_body
      %s26 = ssub.s32 %s21, 1
      %s27 = ssub.s32 %s21, 2
      %s34 = sadd.s32 1, %s29
      %p35 = scmp.ge.s32.totalorder %s34, 2
      %s36 = scalar_select %p35, 0, %s34
      %s37 = sadd.s32 1, %s28
      %s38 = scalar_select %p35, %s37, %s28
      %p39 = scmp.ge.s32.totalorder %s38, 2
      %s40 = scalar_select %p39, 0, %s38
      %s41 = ssub.s32 %s28, %s40
      %s42 = ssub.s32 %s29, %s36
      %s43 = sor.u32 %s41, %s42
      %p44 = scmp.eq.s32.totalorder %s43, 0
      %s46 = sadd.s32 %s45, 1
      %s47 = scalar_select %p44, %s45, %s46
      %p50 = pneg %p44
      %p51 = scmp.eq.s32.totalorder %s21, 3
      %p52 = por %p50, %p51
      %p53 = scmp.ne.s32.totalorder %s45, %s48
      %p54 = scmp.eq.s32.totalorder %s21, 0
      %p55 = por %p53, %p54
      %p56 = scmp.ne.s32.totalorder %s45, %s48
      %p57 = scmp.eq.s32.totalorder %s26, 3
      %p58 = por %p56, %p57
      %p59 = scmp.ne.s32.totalorder %s48, %s49
      %p60 = scmp.eq.s32.totalorder %s26, 0
      %p61 = por %p59, %p60
      %p62 = scmp.ne.s32.totalorder %s48, %s49
      %p63 = scmp.eq.s32.totalorder %s27, 3
      %p64 = por %p62, %p63
      %p66 = scmp.ne.s32.totalorder %s49, %s65
      %p67 = scmp.eq.s32.totalorder %s27, 0
      %p68 = por %p66, %p67
      %s69 = ssub.s32 %s28, %s40
      %p70 = scmp.eq.s32.totalorder %s69, 0
      %s72 = sadd.s32 %s71, 1
      %s73 = scalar_select %p70, %s71, %s72
      %p76 = pneg %p70
      %p77 = scmp.eq.s32.totalorder %s21, 3
      %p78 = por %p76, %p77
      %p79 = scmp.ne.s32.totalorder %s71, %s74
      %p80 = scmp.eq.s32.totalorder %s21, 0
      %p81 = por %p79, %p80
      %p82 = scmp.ne.s32.totalorder %s71, %s74
      %p83 = scmp.eq.s32.totalorder %s26, 3
      %p84 = por %p82, %p83
      %p85 = scmp.ne.s32.totalorder %s74, %s75
      %p86 = scmp.eq.s32.totalorder %s26, 0
      %p87 = por %p85, %p86
      %p88 = scmp.ne.s32.totalorder %s74, %s75
      %p89 = scmp.eq.s32.totalorder %s27, 3
      %p90 = por %p88, %p89
      %p92 = scmp.ne.s32.totalorder %s75, %s91
      %p93 = scmp.eq.s32.totalorder %s27, 0
      %p94 = por %p92, %p93
      %s96 = sadd.s32 %s95, 1
      %p99 = scmp.eq.s32.totalorder %s21, 3
      %p100 = scmp.ne.s32.totalorder %s95, %s97
      %p101 = scmp.eq.s32.totalorder %s21, 0
      %p102 = por %p100, %p101
      %p103 = scmp.ne.s32.totalorder %s95, %s97
      %p104 = scmp.eq.s32.totalorder %s26, 3
      %p105 = por %p103, %p104
      %p106 = scmp.ne.s32.totalorder %s97, %s98
      %p107 = scmp.eq.s32.totalorder %s26, 0
      %p108 = por %p106, %p107
      %p109 = scmp.ne.s32.totalorder %s97, %s98
      %p110 = scmp.eq.s32.totalorder %s27, 3
      %p111 = por %p109, %p110
      %p113 = scmp.ne.s32.totalorder %s98, %s112
      %p114 = scmp.eq.s32.totalorder %s27, 0
      %p115 = por %p113, %p114
      %s117 = sadd.s32 %s116, 1
      %p120 = scmp.eq.s32.totalorder %s21, 3
      %p121 = scmp.ne.s32.totalorder %s116, %s118
      %p122 = scmp.eq.s32.totalorder %s21, 0
      %p123 = por %p121, %p122
      %p124 = scmp.ne.s32.totalorder %s116, %s118
      %p125 = scmp.eq.s32.totalorder %s26, 3
      %p126 = por %p124, %p125
      %p127 = scmp.ne.s32.totalorder %s118, %s119
      %p128 = scmp.eq.s32.totalorder %s26, 0
      %p129 = por %p127, %p128
      %p130 = scmp.ne.s32.totalorder %s118, %s119
      %p131 = scmp.eq.s32.totalorder %s27, 3
      %p132 = por %p130, %p131
      %p134 = scmp.ne.s32.totalorder %s119, %s133
      %p135 = scmp.eq.s32.totalorder %s27, 0
      %p136 = por %p134, %p135
      %s137 = ssub.s32 %s28, %s40
      %p138 = scmp.eq.s32.totalorder %s137, 0
      %s140 = sadd.s32 %s139, 1
      %s141 = scalar_select %p138, %s139, %s140
      %p144 = pneg %p138
      %p145 = scmp.eq.s32.totalorder %s21, 3
      %p146 = por %p144, %p145
      %p147 = scmp.ne.s32.totalorder %s139, %s142
      %p148 = scmp.eq.s32.totalorder %s21, 0
      %p149 = por %p147, %p148
      %p150 = scmp.ne.s32.totalorder %s139, %s142
      %p151 = scmp.eq.s32.totalorder %s26, 3
      %p152 = por %p150, %p151
      %p153 = scmp.ne.s32.totalorder %s142, %s143
      %p154 = scmp.eq.s32.totalorder %s26, 0
      %p155 = por %p153, %p154
      %p156 = scmp.ne.s32.totalorder %s142, %s143
      %p157 = scmp.eq.s32.totalorder %s27, 3
      %p158 = por %p156, %p157
      %p160 = scmp.ne.s32.totalorder %s143, %s159
      %p161 = scmp.eq.s32.totalorder %s27, 0
      %p162 = por %p160, %p161
      %s163 = ssub.s32 %s28, %s40
      %p164 = scmp.eq.s32.totalorder %s163, 0
      %s166 = sadd.s32 %s165, 1
      %s167 = scalar_select %p164, %s165, %s166
      %p170 = pneg %p164
      %p171 = scmp.eq.s32.totalorder %s21, 3
      %p172 = por %p170, %p171
      %p173 = scmp.ne.s32.totalorder %s165, %s168
      %p174 = scmp.eq.s32.totalorder %s21, 0
      %p175 = por %p173, %p174
      %p176 = scmp.ne.s32.totalorder %s165, %s168
      %p177 = scmp.eq.s32.totalorder %s26, 3
      %p178 = por %p176, %p177
      %p179 = scmp.ne.s32.totalorder %s168, %s169
      %p180 = scmp.eq.s32.totalorder %s26, 0
      %p181 = por %p179, %p180
      %p182 = scmp.ne.s32.totalorder %s168, %s169
      %p183 = scmp.eq.s32.totalorder %s27, 3
      %p184 = por %p182, %p183
      %p186 = scmp.ne.s32.totalorder %s169, %s185
      %p187 = scmp.eq.s32.totalorder %s27, 0
      %p188 = por %p186, %p187
      %p189 = scmp.le.s32.totalorder 1, %s21
      %p190 = scmp.lt.s32.totalorder %s21, 5
      %p191 = pnand %p189, %p190
      %p192 = pneg %p191
      // Predicated region
      $region9: #{tpu_custom_call.1} parent=5 // pred_check
        _
      $region10: #{tpu_custom_call.1} parent=5 // pred_check_branch
        %194 = sbr.rel (%p191) target = $region12
      $region11: #{tpu_custom_call.1} parent=5 // pred_region
        %s195 = ssub.s32 %s21, 1
        // Predicated region
        $region13: #{tpu_custom_call.1} parent=11 // pred_check
          %p196 = pneg %p108
        $region14: #{tpu_custom_call.1} parent=11 // pred_check_branch
          %198 = sbr.rel (%p196) target = $region16
        $region15: #{tpu_custom_call.1} parent=11 // pred_region
          _
        $region16: #{tpu_custom_call.1} parent=11 // pred_fallthru
          _
        // Predicated region
        $region17: #{tpu_custom_call.1} parent=11 // pred_check
          %p199 = pneg %p129
        $region18: #{tpu_custom_call.1} parent=11 // pred_check_branch
          %201 = sbr.rel (%p199) target = $region20
        $region19: #{tpu_custom_call.1} parent=11 // pred_region
          _
        $region20: #{tpu_custom_call.1} parent=11 // pred_fallthru
          _
      $region12: #{tpu_custom_call.1} parent=5 // pred_fallthru
        _
      %p202 = scmp.lt.s32.totalorder %s21, 4
      // Predicated region
      $region21: #{tpu_custom_call.1} parent=5 // pred_check
        %p203 = pneg %p202
      $region22: #{tpu_custom_call.1} parent=5 // pred_check_branch
        %205 = sbr.rel (%p203) target = $region24
      $region23: #{tpu_custom_call.1} parent=5 // pred_region
        // Predicated region
        $region25: #{tpu_custom_call.1} parent=23 // pred_check
          %p206 = pneg %p55
        $region26: #{tpu_custom_call.1} parent=23 // pred_check_branch
          %208 = sbr.rel (%p206) target = $region28
        $region27: #{tpu_custom_call.1} parent=23 // pred_region
          %s209 = sand.u32 %s45, 1
          %s210 = scalar_lea.sflag [#allocation6], %s209
          %s211 = sand.u32 %s45, 1
          %s212 = smul.addr %s211, 256
          %s213 = scalar_lea.vmem [#allocation5], %s212
          %s215 = ssub.s32 4096, 4096
          %216 = vsyncadd %s210, %s215
          %s217 = smul.addr %s28, 64
          %s218 = sadd.s32 %s29, %s217
          %s219 = smul.addr %s218, 128
          %s220 = scalar_lea.hbm %s0, %s219
          %s221 = sshll.u32 %s213, 4
          %s222 = int_to_ptr.vmem [resolvable:$true] %s221
          %227 = dma.hbm_to_vmem [thread:$0]  %s220, 4096, %s222, %s210, 256, 128, 8
        $region28: #{tpu_custom_call.1} parent=23 // pred_fallthru
          _
        // Predicated region
        $region29: #{tpu_custom_call.1} parent=23 // pred_check
          %p228 = pneg %p81
        $region30: #{tpu_custom_call.1} parent=23 // pred_check_branch
          %230 = sbr.rel (%p228) target = $region32
        $region31: #{tpu_custom_call.1} parent=23 // pred_region
          %p231 = scmp.lt.s32.totalorder %s28, 1
          %s232 = scalar_select %p231, %s28, 1
          %s233 = smul.addr %s232, 4
          %s234 = smul.addr %s233, 8
          %s235 = scalar_lea.vmem %s1, %s234
        $region32: #{tpu_custom_call.1} parent=23 // pred_fallthru
          _
      $region24: #{tpu_custom_call.1} parent=5 // pred_fallthru
        _
      %p236 = scmp.le.s32.totalorder 1, %s21
      %p237 = scmp.lt.s32.totalorder %s21, 5
      %p238 = pnand %p236, %p237
      %p239 = pneg %p238
      // Predicated region
      $region33: #{tpu_custom_call.1} parent=5 // pred_check
        _
      $region34: #{tpu_custom_call.1} parent=5 // pred_check_branch
        %241 = sbr.rel (%p238) target = $region36
      $region35: #{tpu_custom_call.1} parent=5 // pred_region
        %s242 = ssub.s32 %s21, 1
        %s243 = sand.u32 %s48, 1
        %s244 = scalar_lea.sflag [#allocation6], %s243
        %s245 = sand.u32 %s48, 1
        %s246 = smul.addr %s245, 256
        %s247 = scalar_lea.vmem [#allocation5], %s246
        // Predicated region
        $region37: #{tpu_custom_call.1} parent=35 // pred_check
          %p248 = pneg %p61
        $region38: #{tpu_custom_call.1} parent=35 // pred_check_branch
          %250 = sbr.rel (%p248) target = $region40
        $region39: #{tpu_custom_call.1} parent=35 // pred_region
          %251 = dma.done %s244, 4096
        $region40: #{tpu_custom_call.1} parent=35 // pred_fallthru
          _
        %s252 = sand.u32 %s48, 1
        %s253 = scalar_lea.sflag [#allocation6], %s252
        %s254 = sand.u32 %s48, 1
        %s255 = smul.addr %s254, 256
        %s256 = scalar_lea.vmem [#allocation5], %s255
        %p257 = pneg %p61
        %p258 = pneg %p58
        %p259 = scmp.lt.s32.totalorder %s30, 1
        %s260 = scalar_select %p259, %s30, 1
        %s261 = smul.addr %s260, 4
        %s262 = smul.addr %s261, 8
        %s263 = scalar_lea.vmem %s1, %s262
        %p264 = pneg %p87
        %p265 = pneg %p84
        %p266 = pneg %p108
        %p267 = pneg %p105
        %p268 = pneg %p129
        %p269 = pneg %p126
        %p270 = pneg %p155
        %p271 = pneg %p152
        %s272 = sand.u32 %s142, 1
        %s273 = scalar_lea.sflag [#allocation7], %s272
        %s274 = sand.u32 %s142, 1
        %s275 = smul.addr %s274, 2
        %s276 = scalar_lea.vmem [#allocation8], %s275
        %p277 = pneg %p181
        %p278 = pneg %p178
        %s279 = sand.u32 %s168, 1
        %s280 = scalar_lea.sflag [#allocation10], %s279
        %s281 = sand.u32 %s168, 1
        %s282 = smul.addr %s281, 2
        %s283 = scalar_lea.vmem [#allocation9], %s282
        %p284 = scmp.lt.s32.totalorder %s30, 1
        %s285 = scalar_select %p284, %s30, 1
        %s286 = smul.addr %s285, 4
        %s287 = smul.addr %s286, 8
        %s288 = scalar_lea.vmem %s1, %s287
        %p289 = scmp.eq.s32.totalorder %s31, 0
        // Predicated region
        $region41: #{tpu_custom_call.1} parent=35 // pred_check
          %p290 = pneg %p289
        $region42: #{tpu_custom_call.1} parent=35 // pred_check_branch
          %292 = sbr.rel (%p290) target = $region44
        $region43: #{tpu_custom_call.1} parent=35 // pred_region
          %vm293 = vcmask 0
          %294 = vst.msk [vmem:[#allocation2] sm:$0x1] %vm293, -inf
          %295 = vst.msk [vmem:[#allocation3] sm:$0x1] %vm293, 0.0
          %v296 = vlaneseq
          %vm297 = vcmp.ge.s32.totalorder %v296, 0
          %vm298 = vcmp.lt.s32.totalorder %v296, 256
          %vm299 = vmand %vm297, %vm298
          %300 = vst.msk [vmem:[#allocation4] sm:$0x3] %vm299, 0.0
        $region44: #{tpu_custom_call.1} parent=35 // pred_fallthru
          _
        %v301 = vld [vmem:[%s2] sm:$0xff]
        %v302 = vld [vmem:[%s2 + $0x8] sm:$0xff]
        %v303 = vld [vmem:[%s2 + $0x10] sm:$0xff]
        %v304 = vld [vmem:[%s2 + $0x18] sm:$0xff]
        %v305 = vld [vmem:[%s2 + $0x20] sm:$0xff]
        %v306 = vld [vmem:[%s2 + $0x28] sm:$0xff]
        %v307 = vld [vmem:[%s2 + $0x30] sm:$0xff]
        %v308 = vld [vmem:[%s2 + $0x38] sm:$0xff]
        %v309 = vld [vmem:[%s247] sm:$0xff]
        %v310 = vld [vmem:[%s247 + $0x8] sm:$0xff]
        %v311 = vld [vmem:[%s247 + $0x10] sm:$0xff]
        %v312 = vld [vmem:[%s247 + $0x18] sm:$0xff]
        %v313 = vld [vmem:[%s247 + $0x20] sm:$0xff]
        %v314 = vld [vmem:[%s247 + $0x28] sm:$0xff]
        %v315 = vld [vmem:[%s247 + $0x30] sm:$0xff]
        %v316 = vld [vmem:[%s247 + $0x38] sm:$0xff]
        %v317 = vld [vmem:[%s247 + $0x40] sm:$0xff]
        %v318 = vld [vmem:[%s247 + $0x48] sm:$0xff]
        %v319 = vld [vmem:[%s247 + $0x50] sm:$0xff]
        %v320 = vld [vmem:[%s247 + $0x58] sm:$0xff]
        %v321 = vld [vmem:[%s247 + $0x60] sm:$0xff]
        %v322 = vld [vmem:[%s247 + $0x68] sm:$0xff]
        %v323 = vld [vmem:[%s247 + $0x70] sm:$0xff]
        %v324 = vld [vmem:[%s247 + $0x78] sm:$0xff]
        %v325 = vld [vmem:[%s247 + $0x80] sm:$0xff]
        %v326 = vld [vmem:[%s247 + $0x88] sm:$0xff]
        %v327 = vld [vmem:[%s247 + $0x90] sm:$0xff]
        %v328 = vld [vmem:[%s247 + $0x98] sm:$0xff]
        %v329 = vld [vmem:[%s247 + $0xa0] sm:$0xff]
        %v330 = vld [vmem:[%s247 + $0xa8] sm:$0xff]
        %v331 = vld [vmem:[%s247 + $0xb0] sm:$0xff]
        %v332 = vld [vmem:[%s247 + $0xb8] sm:$0xff]
        %v333 = vld [vmem:[%s247 + $0xc0] sm:$0xff]
        %v334 = vld [vmem:[%s247 + $0xc8] sm:$0xff]
        %v335 = vld [vmem:[%s247 + $0xd0] sm:$0xff]
        %v336 = vld [vmem:[%s247 + $0xd8] sm:$0xff]
        %v337 = vld [vmem:[%s247 + $0xe0] sm:$0xff]
        %v338 = vld [vmem:[%s247 + $0xe8] sm:$0xff]
        %v339 = vld [vmem:[%s247 + $0xf0] sm:$0xff]
        %v340 = vld [vmem:[%s247 + $0xf8] sm:$0xff]
        %v341 = vld [vmem:[%s288] sm:$0xff]
        %v342 = vld [vmem:[%s288 + $0x8] sm:$0xff]
        %v343 = vld [vmem:[%s288 + $0x10] sm:$0xff]
        %v344 = vld [vmem:[%s288 + $0x18] sm:$0xff]
        %346 = vset.pattern.permute.xlu0 0
        %347 = vperm.xlu0 %346, %v341
        %v348 = vpop.permute.xlu0 %347
        %351 = vset.pattern.permute.xlu0 0
        %352 = vperm.xlu0 %351, %v342
        %v353 = vpop.permute.xlu0 %352
        %356 = vset.pattern.permute.xlu0 0
        %357 = vperm.xlu0 %356, %v343
        %v358 = vpop.permute.xlu0 %357
        %361 = vset.pattern.permute.xlu0 0
        %362 = vperm.xlu0 %361, %v344
        %v363 = vpop.permute.xlu0 %362
        %365 = vmatprep.subr.mxu0 0.0
        %366 = vmatpush1.msra.mxu0 %v324
        %367 = vmatprep.subr.mxu0 0.0
        %368 = vmatpush1.msra.mxu0 %v323
        %369 = vmatprep.subr.mxu0 0.0
        %370 = vmatpush1.msra.mxu0 %v322
        %371 = vmatprep.subr.mxu0 0.0
        %372 = vmatpush1.msra.mxu0 %v321
        %373 = vmatprep.subr.mxu0 0.0
        %374 = vmatpush1.msra.mxu0 %v320
        %375 = vmatprep.subr.mxu0 0.0
        %376 = vmatpush1.msra.mxu0 %v319
        %377 = vmatprep.subr.mxu0 0.0
        %378 = vmatpush1.msra.mxu0 %v318
        %379 = vmatprep.subr.mxu0 0.0
        %380 = vmatpush1.msra.mxu0 %v317
        %381 = vmatprep.subr.mxu0 0.0
        %382 = vmatpush1.msra.mxu0 %v316
        %383 = vmatprep.subr.mxu0 0.0
        %384 = vmatpush1.msra.mxu0 %v315
        %385 = vmatprep.subr.mxu0 0.0
        %386 = vmatpush1.msra.mxu0 %v314
        %387 = vmatprep.subr.mxu0 0.0
        %388 = vmatpush1.msra.mxu0 %v313
        %389 = vmatprep.subr.mxu0 0.0
        %390 = vmatpush1.msra.mxu0 %v312
        %391 = vmatprep.subr.mxu0 0.0
        %392 = vmatpush1.msra.mxu0 %v311
        %393 = vmatprep.subr.mxu0 0.0
        %394 = vmatpush1.msra.mxu0 %v310
        %395 = vmatprep.subr.mxu0 0.0
        %396 = vmatpush1.msra.mxu0 %v309
        %397 = vmatprep.subr.mxu0 0.0
        %398 = vmatpush2.msra.mxu0 %v340
        %399 = vmatprep.subr.mxu0 0.0
        %400 = vmatpush2.msra.mxu0 %v339
        %401 = vmatprep.subr.mxu0 0.0
        %402 = vmatpush2.msra.mxu0 %v338
        %403 = vmatprep.subr.mxu0 0.0
        %404 = vmatpush2.msra.mxu0 %v337
        %405 = vmatprep.subr.mxu0 0.0
        %406 = vmatpush2.msra.mxu0 %v336
        %407 = vmatprep.subr.mxu0 0.0
        %408 = vmatpush2.msra.mxu0 %v335
        %409 = vmatprep.subr.mxu0 0.0
        %410 = vmatpush2.msra.mxu0 %v334
        %411 = vmatprep.subr.mxu0 0.0
        %412 = vmatpush2.msra.mxu0 %v333
        %413 = vmatprep.subr.mxu0 0.0
        %414 = vmatpush2.msra.mxu0 %v332
        %415 = vmatprep.subr.mxu0 0.0
        %416 = vmatpush2.msra.mxu0 %v331
        %417 = vmatprep.subr.mxu0 0.0
        %418 = vmatpush2.msra.mxu0 %v330
        %419 = vmatprep.subr.mxu0 0.0
        %420 = vmatpush2.msra.mxu0 %v329
        %421 = vmatprep.subr.mxu0 0.0
        %422 = vmatpush2.msra.mxu0 %v328
        %423 = vmatprep.subr.mxu0 0.0
        %424 = vmatpush2.msra.mxu0 %v327
        %425 = vmatprep.subr.mxu0 0.0
        %426 = vmatpush2.msra.mxu0 %v326
        %427 = vmatprep.subr.mxu0 0.0
        %428 = vmatpush2.msra.mxu0 %v325
        %429 = vmatprep.mubr.f32.mxu0 %v302
        %430 = vmatmul.mubr.f32.gmra.mxu0 %v301
        %v431 = vpop.f32.mrf.mxu0
        %v432 = vadd.f32 %v348, %v431
        %v433 = vpop.f32.mrf.mxu0
        %434 = vmatprep.mubr.f32.mxu0 %v304
        %435 = vmatmul.mubr.f32.gmra.mxu0 %v303
        %v436 = vpop.f32.mrf.mxu0
        %v437 = vadd.f32 %v353, %v436
        %v438 = vpop.f32.mrf.mxu0
        %439 = vmatprep.mubr.f32.mxu0 %v306
        %440 = vmatmul.mubr.f32.gmra.mxu0 %v305
        %v441 = vpop.f32.mrf.mxu0
        %v442 = vadd.f32 %v358, %v441
        %v443 = vpop.f32.mrf.mxu0
        %444 = vmatprep.mubr.f32.mxu0 %v308
        %445 = vmatmul.mubr.f32.gmra.mxu0 %v307
        %v446 = vpop.f32.mrf.mxu0
        %v447 = vadd.f32 %v363, %v446
        %v448 = vpop.f32.mrf.mxu0
        %449 = vdwg.mxu0
        %v450 = vmax.f32 %v432, 0.0
        %v451 = vmax.f32 %v437, 0.0
        %v452 = vmax.f32 %v442, 0.0
        %v453 = vmax.f32 %v447, 0.0
        %v454 = vld [vmem:[%s3] sm:$0xff]
        %v455 = vld [vmem:[%s3 + $0x8] sm:$0xff]
        %v456 = vld [vmem:[%s3 + $0x10] sm:$0xff]
        %v457 = vld [vmem:[%s3 + $0x18] sm:$0xff]
        %459 = vset.pattern.permute.xlu0 0
        %460 = vperm.xlu0 %459, %v454
        %v461 = vpop.permute.xlu0 %460
        %464 = vset.pattern.permute.xlu0 0
        %465 = vperm.xlu0 %464, %v455
        %v466 = vpop.permute.xlu0 %465
        %469 = vset.pattern.permute.xlu0 0
        %470 = vperm.xlu0 %469, %v456
        %v471 = vpop.permute.xlu0 %470
        %474 = vset.pattern.permute.xlu0 0
        %475 = vperm.xlu0 %474, %v457
        %v476 = vpop.permute.xlu0 %475
        %v478 = vmul.f32 %v450, %v461
        %v479 = vmul.f32 %v451, %v466
        %v480 = vmul.f32 %v452, %v471
        %v481 = vmul.f32 %v453, %v476
        %v482 = vadd.f32 %v478, %v479
        %v483 = vadd.f32 %v482, %v480
        %v484 = vadd.f32 %v483, %v481
        %v485 = vrot.slane %v484, 4
        %v486 = vadd.f32 %v484, %v485
        %v487 = vrot.slane %v486, 2
        %v488 = vadd.f32 %v486, %v487
        %v489 = vrot.slane %v488, 1
        %v490 = vadd.f32 %v488, %v489
        %s491 = smul.u32 %s31, 128
        %s492 = sshra.s32 %s491, 7
        %s493 = sand.u32 %s491, 127
        %s494 = scalar_lea.vmem %s283, %s492 [#allocation9]
        %v495 = vlaneseq
        %vm496 = vcmp.ge.s32.totalorder %v495, 0
        %vm497 = vcmp.lt.s32.totalorder %v495, 128
        %vm498 = vmand %vm496, %vm497
        %499 = vst.msk [vmem:[%s494] sm:$0x1] %vm498, %v490
        %v500 = vld [vmem:[#allocation2] sm:$0x1]
        %501 = vmax.xlane.f32.xlu0 %v490
        %v502 = vpop.xlane.xlu0 %501
        %v503 = vmax.f32 %v500, %v502
        %v504 = vsub.f32 %v500, %v503
        %v505 = vmul.f32 %v504, 1.442695
        %v506 = vpow.pop %v505
        %508 = vset.pattern.permute.xlu0 0
        %509 = vperm.xlu0 %508, %v503
        %v510 = vpop.permute.xlu0 %509
        %v512 = vlaneseq
        %v513 = vshrl.u32 %v512, 7
        %v514 = vsub.s32 0, %v513
        %v515 = vrot.slane %v510, %v514
        %v516 = vsub.f32 %v490, %v515
        %v517 = vmul.f32 %v516, 1.442695
        %v518 = vpow.pop %v517
        %v519 = vld [vmem:[#allocation3] sm:$0x1]
        %v520 = vmul.f32 %v506, %v519
        %521 = vadd.xlane.f32.xlu0 %v518
        %v522 = vpop.xlane.xlu0 %521
        %v523 = vadd.f32 %v520, %v522
        %vm524 = vcmask 0
        %525 = vst.msk [vmem:[#allocation3] sm:$0x1] %vm524, %v523
        %526 = vst.msk [vmem:[#allocation2] sm:$0x1] %vm524, %v503
        %v527 = vld [vmem:[%s247] sm:$0xff]
        %v528 = vld [vmem:[%s247 + $0x8] sm:$0xff]
        %v529 = vld [vmem:[%s247 + $0x10] sm:$0xff]
        %v530 = vld [vmem:[%s247 + $0x18] sm:$0xff]
        %v531 = vld [vmem:[%s247 + $0x20] sm:$0xff]
        %v532 = vld [vmem:[%s247 + $0x28] sm:$0xff]
        %v533 = vld [vmem:[%s247 + $0x30] sm:$0xff]
        %v534 = vld [vmem:[%s247 + $0x38] sm:$0xff]
        %v535 = vld [vmem:[%s247 + $0x40] sm:$0xff]
        %v536 = vld [vmem:[%s247 + $0x48] sm:$0xff]
        %v537 = vld [vmem:[%s247 + $0x50] sm:$0xff]
        %v538 = vld [vmem:[%s247 + $0x58] sm:$0xff]
        %v539 = vld [vmem:[%s247 + $0x60] sm:$0xff]
        %v540 = vld [vmem:[%s247 + $0x68] sm:$0xff]
        %v541 = vld [vmem:[%s247 + $0x70] sm:$0xff]
        %v542 = vld [vmem:[%s247 + $0x78] sm:$0xff]
        %v543 = vld [vmem:[%s247 + $0x80] sm:$0xff]
        %v544 = vld [vmem:[%s247 + $0x88] sm:$0xff]
        %v545 = vld [vmem:[%s247 + $0x90] sm:$0xff]
        %v546 = vld [vmem:[%s247 + $0x98] sm:$0xff]
        %v547 = vld [vmem:[%s247 + $0xa0] sm:$0xff]
        %v548 = vld [vmem:[%s247 + $0xa8] sm:$0xff]
        %v549 = vld [vmem:[%s247 + $0xb0] sm:$0xff]
        %v550 = vld [vmem:[%s247 + $0xb8] sm:$0xff]
        %v551 = vld [vmem:[%s247 + $0xc0] sm:$0xff]
        %v552 = vld [vmem:[%s247 + $0xc8] sm:$0xff]
        %v553 = vld [vmem:[%s247 + $0xd0] sm:$0xff]
        %v554 = vld [vmem:[%s247 + $0xd8] sm:$0xff]
        %v555 = vld [vmem:[%s247 + $0xe0] sm:$0xff]
        %v556 = vld [vmem:[%s247 + $0xe8] sm:$0xff]
        %v557 = vld [vmem:[%s247 + $0xf0] sm:$0xff]
        %v558 = vld [vmem:[%s247 + $0xf8] sm:$0xff]
        %559 = vmatprep.subr.mxu0 0.0
        %560 = vmatpush1.xpose.msra.mxu0 %v542
        %561 = vmatprep.subr.mxu0 0.0
        %562 = vmatpush1.xpose.msra.mxu0 %v541
        %563 = vmatprep.subr.mxu0 0.0
        %564 = vmatpush1.xpose.msra.mxu0 %v540
        %565 = vmatprep.subr.mxu0 0.0
        %566 = vmatpush1.xpose.msra.mxu0 %v539
        %567 = vmatprep.subr.mxu0 0.0
        %568 = vmatpush1.xpose.msra.mxu0 %v538
        %569 = vmatprep.subr.mxu0 0.0
        %570 = vmatpush1.xpose.msra.mxu0 %v537
        %571 = vmatprep.subr.mxu0 0.0
        %572 = vmatpush1.xpose.msra.mxu0 %v536
        %573 = vmatprep.subr.mxu0 0.0
        %574 = vmatpush1.xpose.msra.mxu0 %v535
        %575 = vmatprep.subr.mxu0 0.0
        %576 = vmatpush1.xpose.msra.mxu0 %v534
        %577 = vmatprep.subr.mxu0 0.0
        %578 = vmatpush1.xpose.msra.mxu0 %v533
        %579 = vmatprep.subr.mxu0 0.0
        %580 = vmatpush1.xpose.msra.mxu0 %v532
        %581 = vmatprep.subr.mxu0 0.0
        %582 = vmatpush1.xpose.msra.mxu0 %v531
        %583 = vmatprep.subr.mxu0 0.0
        %584 = vmatpush1.xpose.msra.mxu0 %v530
        %585 = vmatprep.subr.mxu0 0.0
        %586 = vmatpush1.xpose.msra.mxu0 %v529
        %587 = vmatprep.subr.mxu0 0.0
        %588 = vmatpush1.xpose.msra.mxu0 %v528
        %589 = vmatprep.subr.mxu0 0.0
        %590 = vmatpush1.xpose.msra.mxu0 %v527
        %591 = vmatprep.subr.mxu0 0.0
        %592 = vmatpush2.xpose.msra.mxu0 %v558
        %593 = vmatprep.subr.mxu0 0.0
        %594 = vmatpush2.xpose.msra.mxu0 %v557
        %595 = vmatprep.subr.mxu0 0.0
        %596 = vmatpush2.xpose.msra.mxu0 %v556
        %597 = vmatprep.subr.mxu0 0.0
        %598 = vmatpush2.xpose.msra.mxu0 %v555
        %599 = vmatprep.subr.mxu0 0.0
        %600 = vmatpush2.xpose.msra.mxu0 %v554
        %601 = vmatprep.subr.mxu0 0.0
        %602 = vmatpush2.xpose.msra.mxu0 %v553
        %603 = vmatprep.subr.mxu0 0.0
        %604 = vmatpush2.xpose.msra.mxu0 %v552
        %605 = vmatprep.subr.mxu0 0.0
        %606 = vmatpush2.xpose.msra.mxu0 %v551
        %607 = vmatprep.subr.mxu0 0.0
        %608 = vmatpush2.xpose.msra.mxu0 %v550
        %609 = vmatprep.subr.mxu0 0.0
        %610 = vmatpush2.xpose.msra.mxu0 %v549
        %611 = vmatprep.subr.mxu0 0.0
        %612 = vmatpush2.xpose.msra.mxu0 %v548
        %613 = vmatprep.subr.mxu0 0.0
        %614 = vmatpush2.xpose.msra.mxu0 %v547
        %615 = vmatprep.subr.mxu0 0.0
        %616 = vmatpush2.xpose.msra.mxu0 %v546
        %617 = vmatprep.subr.mxu0 0.0
        %618 = vmatpush2.xpose.msra.mxu0 %v545
        %619 = vmatprep.subr.mxu0 0.0
        %620 = vmatpush2.xpose.msra.mxu0 %v544
        %621 = vmatprep.subr.mxu0 0.0
        %622 = vmatpush2.xpose.msra.mxu0 %v543
        %623 = vmatprep.mubr.f32.mxu0 0.0
        %624 = vmatmul.mubr.f32.gmra.mxu0 %v518
        %v625 = vpop.f32.mrf.mxu0
        %v626 = vadd.f32 0.0, %v625
        %v627 = vpop.f32.mrf.mxu0
        %v628 = vadd.f32 0.0, %v627
        %629 = vdwg.mxu0
        %v630 = vld [vmem:[#allocation4] sm:$0x3]
        %632 = vset.pattern.permute.xlu0 0
        %633 = vperm.xlu0 %632, %v506
        %v634 = vpop.permute.xlu0 %633
        %v636 = vlaneseq
        %v637 = vshrl.u32 %v636, 7
        %v638 = vsub.s32 0, %v637
        %v639 = vrot.slane %v634, %v638
        %v640 = vmul.f32 %v639, %v630
        %v643 = vcombine.low %v626, %v628
        %v645 = vunpack.c.l.s4 1966171168
        %v646 = vunpack.c.0.s8 %v645
        %v647 = vlaneseq
        %v648 = vshrl.u32 %v647, 7
        %v649 = vsub.s32 %v646, %v648
        %v650 = vrot.slane %v643, %v649
        %v652 = vunpack.c.l.s4 1966171168
        %v653 = vunpack.c.0.s8 %v652
        %v654 = vlaneseq
        %v655 = vshrl.u32 %v654, 7
        %v656 = vsub.s32 %v653, %v655
        %v657 = vrot.slane %v650, %v656
        %v659 = vadd.f32 %v640, %v657
        %vm660 = vcmp.lt.s32.totalorder %v495, 256
        %vm661 = vmand %vm496, %vm660
        %662 = vst.msk [vmem:[#allocation4] sm:$0x3] %vm661, %v659
        %p663 = scmp.eq.s32.totalorder %s31, 1
        // Predicated region
        $region45: #{tpu_custom_call.1} parent=35 // pred_check
          %p664 = pneg %p663
        $region46: #{tpu_custom_call.1} parent=35 // pred_check_branch
          %666 = sbr.rel (%p664) target = $region48
        $region47: #{tpu_custom_call.1} parent=35 // pred_region
          %v667 = vld [vmem:[#allocation3] sm:$0x1]
          %v668 = vrcp.pop %v667
          %v669 = vld [vmem:[#allocation4] sm:$0x3]
          %671 = vset.pattern.permute.xlu0 0
          %672 = vperm.xlu0 %671, %v668
          %v673 = vpop.permute.xlu0 %672
          %v675 = vlaneseq
          %v676 = vshrl.u32 %v675, 7
          %v677 = vsub.s32 0, %v676
          %v678 = vrot.slane %v673, %v677
          %v679 = vmul.f32 %v669, %v678
          %680 = vst.msk [vmem:[%s276] sm:$0x3] %vm661, %v679
          %v681 = vld [vmem:[%s283] sm:$0x3]
          %v682 = vld [vmem:[#allocation2] sm:$0x1]
          %684 = vset.pattern.permute.xlu0 0
          %685 = vperm.xlu0 %684, %v682
          %v686 = vpop.permute.xlu0 %685
          %v688 = vlaneseq
          %v689 = vshrl.u32 %v688, 7
          %v690 = vsub.s32 0, %v689
          %v691 = vrot.slane %v686, %v690
          %v692 = vsub.f32 %v681, %v691
          %v693 = vmul.f32 %v692, 1.442695
          %v694 = vpow.pop %v693
          %v695 = vmul.f32 %v694, %v678
          %696 = vst.msk [vmem:[%s283] sm:$0x3] %vm661, %v695
        $region48: #{tpu_custom_call.1} parent=35 // pred_fallthru
          _
        %s697 = sand.u32 %s142, 1
        %s698 = scalar_lea.sflag [#allocation7], %s697
        %s699 = sand.u32 %s142, 1
        %s700 = smul.addr %s699, 2
        %s701 = scalar_lea.vmem [#allocation8], %s700
        %s702 = sand.u32 %s168, 1
        %s703 = scalar_lea.sflag [#allocation10], %s702
        %s704 = sand.u32 %s168, 1
        %s705 = smul.addr %s704, 2
        %s706 = scalar_lea.vmem [#allocation9], %s705
        // Predicated region
        $region49: #{tpu_custom_call.1} parent=35 // pred_check
          %p707 = pneg %p152
        $region50: #{tpu_custom_call.1} parent=35 // pred_check_branch
          %709 = sbr.rel (%p707) target = $region52
        $region51: #{tpu_custom_call.1} parent=35 // pred_region
          %s711 = ssub.s32 32, 32
          %712 = vsyncadd %s698, %s711
          %s713 = smul.addr %s30, 2
          %s714 = smul.addr %s713, 16
          %s715 = scalar_lea.hbm %s4, %s714
          %s717 = sshll.u32 %s701, 4
          %s718 = int_to_ptr.vmem [resolvable:$true] %s717
          %720 = dma.vmem_to_hbm [thread:$0]  %s718, 32, %s715, %s698
        $region52: #{tpu_custom_call.1} parent=35 // pred_fallthru
          _
        // Predicated region
        $region53: #{tpu_custom_call.1} parent=35 // pred_check
          %p721 = pneg %p178
        $region54: #{tpu_custom_call.1} parent=35 // pred_check_branch
          %723 = sbr.rel (%p721) target = $region56
        $region55: #{tpu_custom_call.1} parent=35 // pred_region
          %s725 = ssub.s32 32, 32
          %726 = vsyncadd %s703, %s725
          %s727 = smul.addr %s30, 2
          %s728 = smul.addr %s727, 16
          %s729 = scalar_lea.hbm %s5, %s728
          %s731 = sshll.u32 %s706, 4
          %s732 = int_to_ptr.vmem [resolvable:$true] %s731
          %734 = dma.vmem_to_hbm [thread:$0]  %s732, 32, %s729, %s703
        $region56: #{tpu_custom_call.1} parent=35 // pred_fallthru
          _
      $region36: #{tpu_custom_call.1} parent=5 // pred_fallthru
        _
      %p735 = scmp.le.s32.totalorder 2, %s21
      // Predicated region
      $region57: #{tpu_custom_call.1} parent=5 // pred_check
        %p736 = pneg %p735
      $region58: #{tpu_custom_call.1} parent=5 // pred_check_branch
        %738 = sbr.rel (%p736) target = $region60
      $region59: #{tpu_custom_call.1} parent=5 // pred_region
        %s739 = ssub.s32 %s21, 2
        // Predicated region
        $region61: #{tpu_custom_call.1} parent=59 // pred_check
          %p740 = pneg %p158
        $region62: #{tpu_custom_call.1} parent=59 // pred_check_branch
          %742 = sbr.rel (%p740) target = $region64
        $region63: #{tpu_custom_call.1} parent=59 // pred_region
          %s743 = sand.u32 %s143, 1
          %s744 = scalar_lea.sflag [#allocation7], %s743
          %s745 = sand.u32 %s143, 1
          %s746 = smul.addr %s745, 2
          %s747 = scalar_lea.vmem [#allocation8], %s746
          %748 = dma.done %s744, 32
        $region64: #{tpu_custom_call.1} parent=59 // pred_fallthru
          _
        // Predicated region
        $region65: #{tpu_custom_call.1} parent=59 // pred_check
          %p749 = pneg %p184
        $region66: #{tpu_custom_call.1} parent=59 // pred_check_branch
          %751 = sbr.rel (%p749) target = $region68
        $region67: #{tpu_custom_call.1} parent=59 // pred_region
          %s752 = sand.u32 %s169, 1
          %s753 = scalar_lea.sflag [#allocation10], %s752
          %s754 = sand.u32 %s169, 1
          %s755 = smul.addr %s754, 2
          %s756 = scalar_lea.vmem [#allocation9], %s755
          %757 = dma.done %s753, 32
        $region68: #{tpu_custom_call.1} parent=59 // pred_fallthru
          _
      $region60: #{tpu_custom_call.1} parent=5 // pred_fallthru
        _
    $region6: #{tpu_custom_call.1} parent=1 // loop_footer
      %s25 = sadd.s32 1, %s21
    $region7: #{tpu_custom_call.1} parent=1 // loop_footer_branch
      %20 = sbr.rel target = $region3
    $region8: #{tpu_custom_call.1} parent=1 // loop_exit
      _
    %758 = vsyncpa [#allocation6], 1
    %s759 = scalar_lea.sflag [#allocation6], 1
    %760 = vsyncpa %s759, 1
    %761 = vsyncpa [#allocation7], 1
    %s762 = scalar_lea.sflag [#allocation7], 1
    %763 = vsyncpa %s762, 1
    %764 = vsyncpa [#allocation10], 1
    %s765 = scalar_lea.sflag [#allocation10], 1
    %766 = vsyncpa %s765, 1

</llo_original>
